<compile_context>
chip_gen: v7x
topology: tpu7x:2x2x1
jax: 0.10.0
libtpu: 0.0.40
codegen_flags: <defaults>
</compile_context>

<pallas_src>
import functools

import jax
import jax.numpy as jnp
from jax import lax
from jax.experimental import pallas as pl
from jax.experimental.pallas import tpu as pltpu


def _focal_loss_kernel(p_ref, w_ref, y_ref, out_ref, acc_ref, *,
                       alpha, gamma, n_valid, tile_n, tiles_per_split):
    c = pl.program_id(0)          # split (TensorCore) index
    j = pl.program_id(1)          # tile index within the split
    t = c * tiles_per_split + j   # logical global tile index

    @pl.when(j == 0)
    def _():
        acc_ref[...] = jnp.zeros_like(acc_ref)

    # Inputs arrive in their storage dtype; upcast in-kernel and keep math in f32.
    p1 = p_ref[...].astype(jnp.float32)          # (M, tile_n)  class-1 ensemble probs
    w = w_ref[...].astype(jnp.float32)           # (M, tile_n)  ensemble weights
    y = y_ref[...].astype(jnp.float32)           # (1, tile_n)  labels

    # Weighted ensemble combination for class 1 only: lane-dense elementwise multiply
    # followed by a single sublane (XLU) reduce over the small M axis.
    x = jnp.sum(w * p1, axis=0, keepdims=True)   # (1, tile_n)  logits = p_bar[:, 1]

    # Numerically stable BCE-with-logits; reuse exp(-|x|) to form the sigmoid.
    e = jnp.exp(-jnp.abs(x))
    ce = jnp.maximum(x, 0.0) - x * y + jnp.log1p(e)
    inv = 1.0 / (1.0 + e)   # exact divide kept: pl.reciprocal(approx=True) breaks 2e-5 rtol
    prob = jnp.where(x >= 0.0, inv, 1.0 - inv)   # == sigmoid(x)

    p_t = prob * y + (1.0 - prob) * (1.0 - y)
    one_m_pt = 1.0 - p_t
    if gamma == 2.0:
        modulator = jnp.square(one_m_pt)
    else:
        # Guard: float-exponent pow can lower to exp(gamma*log(.)); avoid log(0) -> NaN.
        # Differs from the reference only at p_t == 1 (both ~0).
        modulator = jnp.power(jnp.maximum(one_m_pt, 1e-30), gamma)
    loss = ce * modulator

    if alpha >= 0.0:
        # torchvision semantics; with the module default alpha=1.0, y==0 samples get 0 loss.
        alpha_t = alpha * y + (1.0 - alpha) * (1.0 - y)
        loss = alpha_t * loss

    # Tiles [0, full_tiles) are entirely in-bounds and need no masking; only the ragged last
    # tile and any fully-out-of-range overhang tile (from an uneven 2-way split) are masked.
    full_tiles = n_valid // tile_n
    is_ragged = t >= full_tiles

    @pl.when(jnp.logical_not(is_ragged))
    def _():
        acc_ref[...] += loss

    @pl.when(is_ragged)
    def _():
        lane = lax.broadcasted_iota(jnp.int32, (1, tile_n), 1)
        # OOB lanes may hold garbage (even NaN); where-select to 0.0 before accumulation
        # (select does not propagate NaN/Inf from the untaken branch).
        acc_ref[...] += jnp.where(lane + t * tile_n < n_valid, loss, 0.0)

    @pl.when(j == pl.num_programs(1) - 1)
    def _():
        out_ref[...] = jnp.sum(acc_ref[...], keepdims=True)   # (1, 1) per-split partial sum


def _derive_tile_n(n, m, in_itemsize, y_itemsize, *, vmem_budget_bytes=20 << 20,
                   max_tile_n=65536):
    """Largest 128-multiple lane tile whose double-buffered working set fits the budget."""
    # Per-lane bytes: double-buffered p1/w blocks, double-buffered label row, the f32
    # accumulator, ~16 live (1, tile) f32 temporaries and ~3 (M, tile) f32 temporaries
    # (upcasts + the w*p product).
    per_lane = 2 * 2 * m * in_itemsize + 2 * y_itemsize + 4 + 16 * 4 + 3 * m * 4
    tile = int(vmem_budget_bytes // per_lane)
    tile = min(tile, int(max_tile_n))
    tile = max(128, (tile // 128) * 128)
    # Never wider than N rounded up to the 128-lane width (avoids over-padding tiny N).
    tile = min(tile, max(128, ((n + 127) // 128) * 128))
    return tile


def focal_loss_pallas(p_preds, weights_l, y_labels, alpha=1.0, gamma=2.0, *,
                      max_tile_n=65536, relayout_dtype=None, num_splits=2):
    """p_preds: (N, M, K); weights_l: (N, M); y_labels: (N,). Returns scalar mean focal loss.

    relayout_dtype: optional dtype (e.g. jnp.bfloat16) for the transposed (M, N) slabs;
      halves the kernel HBM read at ~bf16 precision. None keeps the native dtype (exact).
    num_splits: size of the leading "parallel" grid axis; 2 lets v7x's two TensorCores each
      reduce half the tiles (harmless serialization on 1-TC v5e/v6e).
    """
    N, M, K = p_preds.shape
    assert weights_l.shape == (N, M) and y_labels.shape == (N,)

    # Lane-dense relayout (layout plumbing only): only the class-1 column goes through the
    # kernel, with the large batch dim N on the 128-wide lane axis.
    p1 = jnp.transpose(p_preds[:, :, 1])          # (M, N)
    w_t = jnp.transpose(weights_l)                # (M, N)
    if relayout_dtype is not None:
        p1 = p1.astype(relayout_dtype)
        w_t = w_t.astype(relayout_dtype)
    y_row = jnp.reshape(y_labels, (1, N))         # (1, N)

    tile_n = _derive_tile_n(N, M, p1.dtype.itemsize, y_row.dtype.itemsize,
                            max_tile_n=max_tile_n)
    n_tiles = pl.cdiv(N, tile_n)                  # no jnp.pad: ragged tile masked in-kernel
    num_splits = int(num_splits) if n_tiles >= 2 else 1
    num_splits = max(1, min(num_splits, n_tiles))
    tiles_per_split = pl.cdiv(n_tiles, num_splits)

    kernel = functools.partial(
        _focal_loss_kernel, alpha=float(alpha), gamma=float(gamma),
        n_valid=N, tile_n=tile_n, tiles_per_split=tiles_per_split)

    def in_map(c, j):
        # Clamp: when n_tiles does not split evenly, the overhang steps re-read the last
        # valid tile; the kernel fully masks them (logical tile index >= full coverage).
        return (0, jnp.minimum(c * tiles_per_split + j, n_tiles - 1))

    grid_spec = pltpu.PrefetchScalarGridSpec(
        num_scalar_prefetch=0,
        grid=(num_splits, tiles_per_split),
        in_specs=[
            pl.BlockSpec((M, tile_n), in_map),
            pl.BlockSpec((M, tile_n), in_map),
            pl.BlockSpec((1, tile_n), in_map),
        ],
        out_specs=pl.BlockSpec((1, 1), lambda c, j: (c, 0)),
        scratch_shapes=[pltpu.VMEM((1, tile_n), jnp.float32)],
    )

    out = pl.pallas_call(
        kernel,
        out_shape=jax.ShapeDtypeStruct((num_splits, 1), jnp.float32),
        grid_spec=grid_spec,
        compiler_params=pltpu.CompilerParams(
            dimension_semantics=("parallel", "arbitrary"),
            vmem_limit_bytes=32 * 1024 * 1024),
    )(p1, w_t, y_row)
    # Per-split partial sums -> mean (reduction='mean').
    return jnp.sum(out) * (1.0 / N)


def focal_loss_ref(p_preds, weights_l, y_labels, alpha=1.0, gamma=2.0):
    """Plain-JAX reference mirroring the PyTorch forward."""
    p_bar = jnp.einsum('nm,nmk->nk', weights_l.astype(jnp.float32),
                       p_preds.astype(jnp.float32))
    x = p_bar[:, 1]
    y = y_labels.astype(jnp.float32)
    prob = jax.nn.sigmoid(x)
    ce = jnp.maximum(x, 0.0) - x * y + jnp.log1p(jnp.exp(-jnp.abs(x)))
    p_t = prob * y + (1.0 - prob) * (1.0 - y)
    loss = ce * (1.0 - p_t) ** gamma
    if alpha >= 0:
        alpha_t = alpha * y + (1.0 - alpha) * (1.0 - y)
        loss = alpha_t * loss
    return jnp.mean(loss)


if __name__ == "__main__":
    # Small shapes consistent with the module: N samples, M ensemble members, K=2 classes.
    N, M, K = 300, 8, 2
    key = jax.random.PRNGKey(0)
    k1, k2, k3 = jax.random.split(key, 3)

    p_preds = jax.nn.softmax(jax.random.normal(k1, (N, M, K), dtype=jnp.float32), axis=-1)
    weights_l = jax.nn.softmax(jax.random.normal(k2, (N, M), dtype=jnp.float32), axis=-1)
    y_labels = jax.random.bernoulli(k3, 0.5, (N,)).astype(jnp.int32)

    ref = focal_loss_ref(p_preds, weights_l, y_labels, alpha=1.0, gamma=2.0)

    # 1) Default path: VMEM-budget tile (single ragged tile at this small N), f32 inputs.
    out = jax.block_until_ready(
        focal_loss_pallas(p_preds, weights_l, y_labels, alpha=1.0, gamma=2.0))
    assert jnp.allclose(out, ref, rtol=2e-5, atol=1e-6), (out, ref)

    # 2) Forced small tiles: exercises multi-tile accumulation, the 2-way split, the fully
    #    masked overhang step, and the ragged-tile mask.
    out_tiled = jax.block_until_ready(
        focal_loss_pallas(p_preds, weights_l, y_labels, alpha=1.0, gamma=2.0,
                          max_tile_n=128))
    assert jnp.allclose(out_tiled, ref, rtol=2e-5, atol=1e-6), (out_tiled, ref)

    # 3) bf16 relayout (halves kernel HBM read); looser tolerance for bf16 input rounding.
    out_bf16 = jax.block_until_ready(
        focal_loss_pallas(p_preds, weights_l, y_labels, alpha=1.0, gamma=2.0,
                          relayout_dtype=jnp.bfloat16))
    assert jnp.allclose(out_bf16, ref, rtol=5e-2, atol=5e-3), (out_bf16, ref)

    print("KERNEL_OK")
</pallas_src>

<mosaic_0001>
module attributes {stable_mosaic.version = 11 : i64} {
  func.func @_focal_loss_kernel(%arg0: i32, %arg1: i32, %arg2: memref<8x384xf32, #tpu.memory_space<vmem>>, %arg3: memref<8x384xf32, #tpu.memory_space<vmem>>, %arg4: memref<1x384xi32, #tpu.memory_space<vmem>>, %arg5: memref<1x1xf32, #tpu.memory_space<vmem>>, %arg6: memref<1x384xf32, #tpu.memory_space<vmem>>) attributes {dimension_semantics = [#tpu.dimension_semantics<parallel>, #tpu.dimension_semantics<arbitrary>], iteration_bounds = array<i64: 1, 1>, scalar_prefetch = 0 : i64, scratch_operands = 1 : i64, tpu.core_type = #tpu.core_type<tc>, window_params = [{transform_indices = @transform_0, window_bounds = array<i64: 8, 384>}, {transform_indices = @transform_1, window_bounds = array<i64: 8, 384>}, {transform_indices = @transform_2, window_bounds = array<i64: 1, 384>}, {transform_indices = @transform_3, window_bounds = array<i64: 1, 1>}]} {
    %c1_i32 = arith.constant 1 : i32
    %0 = arith.muli %arg0, %c1_i32 : i32
    %1 = arith.addi %0, %arg1 : i32
    %c0_i32 = arith.constant 0 : i32
    %2 = arith.cmpi eq, %arg1, %c0_i32 : i32
    %3 = arith.extui %2 : i1 to i32
    %c0_i32_0 = arith.constant 0 : i32
    %4 = arith.cmpi ne, %3, %c0_i32_0 : i32
    scf.if %4 {
      %cst_23 = arith.constant 0.000000e+00 : f32
      %59 = vector.broadcast %cst_23 : f32 to vector<1x384xf32>
      %c0_24 = arith.constant 0 : index
      %c0_25 = arith.constant 0 : index
      %60 = vector.load %arg6[%c0_24, %c0_25] : memref<1x384xf32, #tpu.memory_space<vmem>>, vector<1x384xf32>
      tpu.vector_store %arg6[%c0_24, %c0_25], %59 {strides = array<i32>} : memref<1x384xf32, #tpu.memory_space<vmem>>, vector<1x384xf32>,
    } else {
    }
    %c0 = arith.constant 0 : index
    %c0_1 = arith.constant 0 : index
    %5 = vector.load %arg2[%c0, %c0_1] : memref<8x384xf32, #tpu.memory_space<vmem>>, vector<8x384xf32>
    %c0_2 = arith.constant 0 : index
    %c0_3 = arith.constant 0 : index
    %6 = vector.load %arg3[%c0_2, %c0_3] : memref<8x384xf32, #tpu.memory_space<vmem>>, vector<8x384xf32>
    %c0_4 = arith.constant 0 : index
    %c0_5 = arith.constant 0 : index
    %7 = vector.load %arg4[%c0_4, %c0_5] : memref<1x384xi32, #tpu.memory_space<vmem>>, vector<1x384xi32>
    %8 = arith.sitofp %7 : vector<1x384xi32> to vector<1x384xf32>
    %9 = arith.mulf %6, %5 : vector<8x384xf32>
    %cst = arith.constant dense<0.000000e+00> : vector<384xf32>
    %10 = vector.multi_reduction <add>, %9, %cst [0] : vector<8x384xf32> to vector<384xf32>
    %11 = vector.shape_cast %10 : vector<384xf32> to vector<1x384xf32>
    %12 = math.absf %11 : vector<1x384xf32>
    %cst_6 = arith.constant 0.000000e+00 : f32
    %13 = vector.broadcast %cst_6 : f32 to vector<1x384xf32>
    %14 = arith.subf %13, %12 : vector<1x384xf32>
    %15 = math.exp %14 : vector<1x384xf32>
    %cst_7 = arith.constant 0.000000e+00 : f32
    %16 = vector.broadcast %cst_7 : f32 to vector<1x384xf32>
    %17 = arith.maximumf %11, %16 : vector<1x384xf32>
    %18 = arith.mulf %11, %8 : vector<1x384xf32>
    %19 = arith.subf %17, %18 : vector<1x384xf32>
    %20 = math.log1p %15 : vector<1x384xf32>
    %21 = arith.addf %19, %20 : vector<1x384xf32>
    %cst_8 = arith.constant 1.000000e+00 : f32
    %22 = vector.broadcast %cst_8 : f32 to vector<1x384xf32>
    %23 = arith.addf %22, %15 : vector<1x384xf32>
    %cst_9 = arith.constant 1.000000e+00 : f32
    %24 = vector.broadcast %cst_9 : f32 to vector<1x384xf32>
    %25 = arith.divf %24, %23 : vector<1x384xf32>
    %cst_10 = arith.constant 0.000000e+00 : f32
    %26 = vector.broadcast %cst_10 : f32 to vector<1x384xf32>
    %27 = arith.cmpf oge, %11, %26 : vector<1x384xf32>
    %cst_11 = arith.constant 1.000000e+00 : f32
    %28 = vector.broadcast %cst_11 : f32 to vector<1x384xf32>
    %29 = arith.subf %28, %25 : vector<1x384xf32>
    %30 = arith.select %27, %25, %29 : vector<1x384xi1>, vector<1x384xf32>
    %31 = arith.mulf %30, %8 : vector<1x384xf32>
    %cst_12 = arith.constant 1.000000e+00 : f32
    %32 = vector.broadcast %cst_12 : f32 to vector<1x384xf32>
    %33 = arith.subf %32, %30 : vector<1x384xf32>
    %cst_13 = arith.constant 1.000000e+00 : f32
    %34 = vector.broadcast %cst_13 : f32 to vector<1x384xf32>
    %35 = arith.subf %34, %8 : vector<1x384xf32>
    %36 = arith.mulf %33, %35 : vector<1x384xf32>
    %37 = arith.addf %31, %36 : vector<1x384xf32>
    %cst_14 = arith.constant 1.000000e+00 : f32
    %38 = vector.broadcast %cst_14 : f32 to vector<1x384xf32>
    %39 = arith.subf %38, %37 : vector<1x384xf32>
    %40 = arith.mulf %39, %39 : vector<1x384xf32>
    %41 = arith.mulf %21, %40 : vector<1x384xf32>
    %cst_15 = arith.constant 1.000000e+00 : f32
    %42 = vector.broadcast %cst_15 : f32 to vector<1x384xf32>
    %43 = arith.mulf %42, %8 : vector<1x384xf32>
    %cst_16 = arith.constant 1.000000e+00 : f32
    %44 = vector.broadcast %cst_16 : f32 to vector<1x384xf32>
    %45 = arith.subf %44, %8 : vector<1x384xf32>
    %cst_17 = arith.constant 0.000000e+00 : f32
    %46 = vector.broadcast %cst_17 : f32 to vector<1x384xf32>
    %47 = arith.mulf %46, %45 : vector<1x384xf32>
    %48 = arith.addf %43, %47 : vector<1x384xf32>
    %49 = arith.mulf %48, %41 : vector<1x384xf32>
    %c0_i32_18 = arith.constant 0 : i32
    %50 = arith.cmpi sge, %1, %c0_i32_18 : i32
    %true = arith.constant true
    %51 = arith.xori %50, %true : i1
    %52 = arith.extui %51 : i1 to i32
    %c0_i32_19 = arith.constant 0 : i32
    %53 = arith.cmpi ne, %52, %c0_i32_19 : i32
    scf.if %53 {
      %c0_23 = arith.constant 0 : index
      %c0_24 = arith.constant 0 : index
      %59 = vector.load %arg6[%c0_23, %c0_24] : memref<1x384xf32, #tpu.memory_space<vmem>>, vector<1x384xf32>
      %60 = arith.addf %59, %49 : vector<1x384xf32>
      %c0_25 = arith.constant 0 : index
      %c0_26 = arith.constant 0 : index
      %61 = vector.load %arg6[%c0_25, %c0_26] : memref<1x384xf32, #tpu.memory_space<vmem>>, vector<1x384xf32>
      tpu.vector_store %arg6[%c0_25, %c0_26], %60 {strides = array<i32>} : memref<1x384xf32, #tpu.memory_space<vmem>>, vector<1x384xf32>,
    } else {
    }
    %54 = arith.extui %50 : i1 to i32
    %c0_i32_20 = arith.constant 0 : i32
    %55 = arith.cmpi ne, %54, %c0_i32_20 : i32
    scf.if %55 {
      %59 = tpu.iota {dimensions = array<i32: 1>} : vector<1x384xi32>
      %c0_23 = arith.constant 0 : index
      %c0_24 = arith.constant 0 : index
      %60 = vector.load %arg6[%c0_23, %c0_24] : memref<1x384xf32, #tpu.memory_space<vmem>>, vector<1x384xf32>
      %c384_i32 = arith.constant 384 : i32
      %61 = arith.muli %1, %c384_i32 : i32
      %62 = vector.broadcast %61 : i32 to vector<1x384xi32>
      %63 = arith.addi %59, %62 : vector<1x384xi32>
      %c300_i32 = arith.constant 300 : i32
      %64 = vector.broadcast %c300_i32 : i32 to vector<1x384xi32>
      %65 = arith.cmpi slt, %63, %64 : vector<1x384xi32>
      %cst_25 = arith.constant 0.000000e+00 : f32
      %66 = vector.broadcast %cst_25 : f32 to vector<1x384xf32>
      %67 = arith.select %65, %49, %66 : vector<1x384xi1>, vector<1x384xf32>
      %68 = arith.addf %60, %67 : vector<1x384xf32>
      %c0_26 = arith.constant 0 : index
      %c0_27 = arith.constant 0 : index
      %69 = vector.load %arg6[%c0_26, %c0_27] : memref<1x384xf32, #tpu.memory_space<vmem>>, vector<1x384xf32>
      tpu.vector_store %arg6[%c0_26, %c0_27], %68 {strides = array<i32>} : memref<1x384xf32, #tpu.memory_space<vmem>>, vector<1x384xf32>,
    } else {
    }
    %c0_i32_21 = arith.constant 0 : i32
    %56 = arith.cmpi eq, %arg1, %c0_i32_21 : i32
    %57 = arith.extui %56 : i1 to i32
    %c0_i32_22 = arith.constant 0 : i32
    %58 = arith.cmpi ne, %57, %c0_i32_22 : i32
    scf.if %58 {
      %c0_23 = arith.constant 0 : index
      %c0_24 = arith.constant 0 : index
      %59 = vector.load %arg6[%c0_23, %c0_24] : memref<1x384xf32, #tpu.memory_space<vmem>>, vector<1x384xf32>
      %60 = vector.shape_cast %59 : vector<1x384xf32> to vector<1x1x384xf32>
      %cst_25 = arith.constant dense<0.000000e+00> : vector<1xf32>
      %61 = vector.multi_reduction <add>, %60, %cst_25 [1, 2] : vector<1x1x384xf32> to vector<1xf32>
      %62 = vector.shape_cast %61 : vector<1xf32> to vector<1x1x1xf32>
      %63 = vector.extract %62[0, 0, 0] : f32 from vector<1x1x1xf32>
      %64 = vector.broadcast %63 : f32 to vector<1x1xf32>
      %c0_26 = arith.constant 0 : index
      %c0_27 = arith.constant 0 : index
      %65 = vector.load %arg5[%c0_26, %c0_27] : memref<1x1xf32, #tpu.memory_space<vmem>>, vector<1x1xf32>
      tpu.vector_store %arg5[%c0_26, %c0_27], %64 {strides = array<i32>} : memref<1x1xf32, #tpu.memory_space<vmem>>, vector<1x1xf32>,
    } else {
    }
    return
  }
  func.func @transform_0(%arg0: i32, %arg1: i32) -> (i32, i32) {
    %c1_i32 = arith.constant 1 : i32
    %0 = arith.muli %arg0, %c1_i32 : i32
    %1 = arith.addi %0, %arg1 : i32
    %c0_i32 = arith.constant 0 : i32
    %2 = arith.minsi %1, %c0_i32 : i32
    %c0_i32_0 = arith.constant 0 : i32
    %c0_i32_1 = arith.constant 0 : i32
    return %c0_i32_0, %2 : i32, i32
  }
  func.func @transform_1(%arg0: i32, %arg1: i32) -> (i32, i32) {
    %c1_i32 = arith.constant 1 : i32
    %0 = arith.muli %arg0, %c1_i32 : i32
    %1 = arith.addi %0, %arg1 : i32
    %c0_i32 = arith.constant 0 : i32
    %2 = arith.minsi %1, %c0_i32 : i32
    %c0_i32_0 = arith.constant 0 : i32
    %c0_i32_1 = arith.constant 0 : i32
    return %c0_i32_0, %2 : i32, i32
  }
  func.func @transform_2(%arg0: i32, %arg1: i32) -> (i32, i32) {
    %c1_i32 = arith.constant 1 : i32
    %0 = arith.muli %arg0, %c1_i32 : i32
    %1 = arith.addi %0, %arg1 : i32
    %c0_i32 = arith.constant 0 : i32
    %2 = arith.minsi %1, %c0_i32 : i32
    %c0_i32_0 = arith.constant 0 : i32
    %c0_i32_1 = arith.constant 0 : i32
    return %c0_i32_0, %2 : i32, i32
  }
  func.func @transform_3(%arg0: i32, %arg1: i32) -> (i32, i32) {
    %c0_i32 = arith.constant 0 : i32
    %c0_i32_0 = arith.constant 0 : i32
    return %arg0, %c0_i32 : i32, i32
  }
}

</mosaic_0001>

<llo_original>
// kernel: tpu_custom_call.1
$region0: #{tpu_custom_call.1}
  #allocation0 [shape = 'u32[]', space=smem, size = 0x4, offset = 0x4, fixed_abs, tag = 'smem constant byte address 0x4 - core index']
  #allocation1 [shape = 'u32[144,128]{1,0:T(1,128)}', space=vmem, size = 0x12000, scoped, tag = 'internal scratch']
  #allocation2 [shape = 'f32[1,384]{1,0:T(1,128)}', space=vmem, size = 0x600, scoped, tag = 'scratch operand']
  %s0 = inlined_call_operand.hbm [shape: f32[8,300], index: 0, kind: input, shape index: {}]
  %s1 = inlined_call_operand.hbm [shape: f32[8,300], index: 1, kind: input, shape index: {}]
  %s2 = inlined_call_operand.vmem [shape: s32[1,300], index: 2, kind: input, shape index: {}]
  %s3 = inlined_call_operand.hbm [shape: f32[1,1], index: 3, kind: output, shape index: {}]
  %s4 = sld [smem:[#allocation0]]
  $region46: #{tpu_custom_call.1} parent=0
    _
  %s6 = ssub.s32 1, %s4
  %s7 = scalar_select 0, %s6, %s4
  $region1: #{tpu_custom_call.1} parent=0
    #allocation3 [shape = 'u8[12288]{0}', space=vmem, size = 0x3000, scoped, tag = 'input window, operand 0, single buffered']
    #allocation4 [shape = 's32[1]{0}', space=sflag, size = 0x4, scoped, tag = 'scoped memory for tpu_custom_call.1']
    #allocation5 [shape = 's32[1]{0}', space=sflag, size = 0x4, scoped, tag = 'scoped memory for tpu_custom_call.1']
    #allocation6 [shape = 'u8[12288]{0}', space=vmem, size = 0x3000, scoped, tag = 'input window, operand 1, single buffered']
    #allocation7 [shape = 's32[1]{0}', space=sflag, size = 0x4, scoped, tag = 'scoped memory for tpu_custom_call.1']
    #allocation8 [shape = 'u8[512]{0}', space=vmem, size = 0x400, scoped, tag = 'output window, operand 0, single buffered']
    %8 = vsyncpa [#allocation4], 0
    %9 = vsyncpa [#allocation7], 0
    %10 = vsyncpa [#allocation5], 0
    // Predicated region
    $region2: #{tpu_custom_call.1} parent=1 // pred_check
      _
    $region3: #{tpu_custom_call.1} parent=1 // pred_check_branch
      %12 = sbr.rel (0) target = $region5
    $region4: #{tpu_custom_call.1} parent=1 // pred_region
      %s13 = sadd.s32 0, 0
      %p14 = scmp.lt.s32.totalorder %s13, 0
      %s15 = scalar_select %p14, %s13, 0
      %s16 = smul.u32 3, %s15
      %s18 = ssub.s32 384, 384
      %19 = vsyncadd [#allocation4], %s18
      %s20 = smul.addr %s16, 128
      %s21 = scalar_lea.hbm %s0, %s20
      %s23 = sshll.u32 [#allocation3], 4
      %s24 = int_to_ptr.vmem [resolvable:$true] %s23
      %26 = dma.hbm_to_vmem [thread:$0]  %s21, 384, %s24, [#allocation4]
    $region5: #{tpu_custom_call.1} parent=1 // pred_fallthru
      _
    // Predicated region
    $region6: #{tpu_custom_call.1} parent=1 // pred_check
      _
    $region7: #{tpu_custom_call.1} parent=1 // pred_check_branch
      %28 = sbr.rel (0) target = $region9
    $region8: #{tpu_custom_call.1} parent=1 // pred_region
      %s29 = sadd.s32 0, 0
      %p30 = scmp.lt.s32.totalorder %s29, 0
      %s31 = scalar_select %p30, %s29, 0
      %s32 = smul.u32 3, %s31
      %s34 = ssub.s32 384, 384
      %35 = vsyncadd [#allocation7], %s34
      %s36 = smul.addr %s32, 128
      %s37 = scalar_lea.hbm %s1, %s36
      %s39 = sshll.u32 [#allocation6], 4
      %s40 = int_to_ptr.vmem [resolvable:$true] %s39
      %42 = dma.hbm_to_vmem [thread:$0]  %s37, 384, %s40, [#allocation7]
    $region9: #{tpu_custom_call.1} parent=1 // pred_fallthru
      _
    // Predicated region
    $region10: #{tpu_custom_call.1} parent=1 // pred_check
      _
    $region11: #{tpu_custom_call.1} parent=1 // pred_check_branch
      %44 = sbr.rel (0) target = $region13
    $region12: #{tpu_custom_call.1} parent=1 // pred_region
      %s45 = sadd.s32 0, 0
      %p46 = scmp.lt.s32.totalorder %s45, 0
      %s47 = scalar_select %p46, %s45, 0
      %s48 = smul.u32 3, %s47
      %p49 = scmp.lt.s32.totalorder %s48, 2
      %s50 = scalar_select %p49, %s48, 2
      %s51 = scalar_lea.vmem %s2, %s50
      %s52 = sadd.s32 0, 0
      %p53 = scmp.lt.s32.totalorder %s52, 0
      %s54 = scalar_select %p53, %s52, 0
      %s55 = smul.u32 3, %s54
    $region13: #{tpu_custom_call.1} parent=1 // pred_fallthru
      _
    // Predicated region
    $region14: #{tpu_custom_call.1} parent=1 // pred_check
      _
    $region15: #{tpu_custom_call.1} parent=1 // pred_check_branch
      %57 = sbr.rel (0) target = $region17
    $region16: #{tpu_custom_call.1} parent=1 // pred_region
      %58 = dma.done [#allocation4], 384
    $region17: #{tpu_custom_call.1} parent=1 // pred_fallthru
      _
    // Predicated region
    $region18: #{tpu_custom_call.1} parent=1 // pred_check
      _
    $region19: #{tpu_custom_call.1} parent=1 // pred_check_branch
      %60 = sbr.rel (0) target = $region21
    $region20: #{tpu_custom_call.1} parent=1 // pred_region
      %61 = dma.done [#allocation7], 384
    $region21: #{tpu_custom_call.1} parent=1 // pred_fallthru
      _
    %s62 = sadd.s32 0, 0
    %p63 = scmp.lt.s32.totalorder %s62, 0
    %s64 = scalar_select %p63, %s62, 0
    %s65 = smul.u32 3, %s64
    %p66 = scmp.lt.s32.totalorder %s65, 2
    %s67 = scalar_select %p66, %s65, 2
    %s68 = scalar_lea.vmem %s2, %s67
    %s69 = sadd.s32 0, 0
    %p70 = scmp.lt.s32.totalorder %s69, 0
    %s71 = scalar_select %p70, %s69, 0
    %s72 = smul.u32 3, %s71
    %s73 = sadd.s32 0, 0
    %p74 = scmp.lt.s32.totalorder %s73, 0
    %s75 = scalar_select %p74, %s73, 0
    %s76 = smul.u32 3, %s75
    %s77 = sadd.s32 0, 0
    %p78 = scmp.lt.s32.totalorder %s77, 0
    %s79 = scalar_select %p78, %s77, 0
    %s80 = smul.u32 3, %s79
    %p81 = scmp.lt.s32.totalorder %s80, 2
    %s82 = scalar_select %p81, %s80, 2
    %s83 = scalar_lea.vmem %s2, %s82
    %s84 = sadd.s32 0, 0
    %p85 = scmp.lt.s32.totalorder %s84, 0
    %s86 = scalar_select %p85, %s84, 0
    %s87 = smul.u32 3, %s86
    %s88 = sadd.s32 0, 0
    %p89 = scmp.eq.s32.totalorder 0, 0
    // Predicated region
    $region22: #{tpu_custom_call.1} parent=1 // pred_check
      %p90 = pneg %p89
    $region23: #{tpu_custom_call.1} parent=1 // pred_check_branch
      %92 = sbr.rel (%p90) target = $region25
    $region24: #{tpu_custom_call.1} parent=1 // pred_region
      %v93 = vlaneseq
      %vm94 = vcmp.ge.s32.totalorder %v93, 0
      %vm95 = vcmp.lt.s32.totalorder %v93, 384
      %vm96 = vmand %vm94, %vm95
      %97 = vst.msk [vmem:[#allocation2] sm:$0x7] %vm96, 0.0
    $region25: #{tpu_custom_call.1} parent=1 // pred_fallthru
      _
    %v98 = vld [vmem:[#allocation3] sm:$0xff]
    %v99 = vld [vmem:[#allocation3 + $0x8] sm:$0xff]
    %v100 = vld [vmem:[#allocation3 + $0x10] sm:$0xff]
    %v101 = vld [vmem:[#allocation6] sm:$0xff]
    %v102 = vld [vmem:[#allocation6 + $0x8] sm:$0xff]
    %v103 = vld [vmem:[#allocation6 + $0x10] sm:$0xff]
    %v104 = vld [vmem:[%s83] sm:$0x7]
    %v105 = vcvt.s32.f32 %v104
    %v106 = vmul.f32 %v101, %v98
    %v107 = vmul.f32 %v102, %v99
    %v108 = vmul.f32 %v103, %v100
    %v109 = vrot.slane %v106, 4
    %v110 = vadd.f32 %v106, %v109
    %v111 = vrot.slane %v110, 2
    %v112 = vadd.f32 %v110, %v111
    %v113 = vrot.slane %v112, 1
    %v114 = vadd.f32 %v112, %v113
    %v115 = vrot.slane %v107, 4
    %v116 = vadd.f32 %v107, %v115
    %v117 = vrot.slane %v116, 2
    %v118 = vadd.f32 %v116, %v117
    %v119 = vrot.slane %v118, 1
    %v120 = vadd.f32 %v118, %v119
    %v121 = vrot.slane %v108, 4
    %v122 = vadd.f32 %v108, %v121
    %v123 = vrot.slane %v122, 2
    %v124 = vadd.f32 %v122, %v123
    %v125 = vrot.slane %v124, 1
    %v126 = vadd.f32 %v124, %v125
    %v127 = vand.u32 2147483647, %v114
    %v128 = vand.u32 2147483647, %v120
    %v129 = vand.u32 2147483647, %v126
    %v130 = vsub.f32 0.0, %v127
    %v131 = vsub.f32 0.0, %v128
    %v132 = vsub.f32 0.0, %v129
    %v133 = vmul.f32 %v130, 1.442695
    %v134 = vpow.pop %v133
    %v135 = vmul.f32 %v131, 1.442695
    %v136 = vpow.pop %v135
    %v137 = vmul.f32 %v132, 1.442695
    %v138 = vpow.pop %v137
    %v139 = vmax.f32 %v114, 0.0
    %v140 = vmax.f32 %v120, 0.0
    %v141 = vmax.f32 %v126, 0.0
    %v143 = vlaneseq
    %v144 = vshrl.u32 %v143, 7
    %v145 = vsub.s32 0, %v144
    %v146 = vrot.slane %v105, %v145
    %v147 = vlaneseq
    %v148 = vshrl.u32 %v147, 7
    %v149 = vsub.s32 1, %v148
    %v150 = vrot.slane %v105, %v149
    %v151 = vlaneseq
    %v152 = vshrl.u32 %v151, 7
    %v153 = vsub.s32 2, %v152
    %v154 = vrot.slane %v105, %v153
    %v158 = vmul.f32 %v114, %v146
    %v159 = vmul.f32 %v120, %v150
    %v160 = vmul.f32 %v126, %v154
    %v161 = vsub.f32 %v139, %v158
    %v162 = vsub.f32 %v140, %v159
    %v163 = vsub.f32 %v141, %v160
    %v164 = vadd.f32 %v134, 1.0
    %v165 = vlog2.pop %v164
    %v166 = vmul.f32 %v165, 0.6931472
    %v167 = vmul.f32 -0.5, %v134
    %v168 = vadd.f32 %v167, 1.0
    %v169 = vmul.f32 %v168, %v134
    %v170 = vand.u32 2147483647, %v134
    %vm171 = vcmp.lt.f32.partialorder %v170, 0.0004427343
    %v172 = vsel %vm171, %v169, %v166
    %v173 = vadd.f32 %v136, 1.0
    %v174 = vlog2.pop %v173
    %v175 = vmul.f32 %v174, 0.6931472
    %v176 = vmul.f32 -0.5, %v136
    %v177 = vadd.f32 %v176, 1.0
    %v178 = vmul.f32 %v177, %v136
    %v179 = vand.u32 2147483647, %v136
    %vm180 = vcmp.lt.f32.partialorder %v179, 0.0004427343
    %v181 = vsel %vm180, %v178, %v175
    %v182 = vadd.f32 %v138, 1.0
    %v183 = vlog2.pop %v182
    %v184 = vmul.f32 %v183, 0.6931472
    %v185 = vmul.f32 -0.5, %v138
    %v186 = vadd.f32 %v185, 1.0
    %v187 = vmul.f32 %v186, %v138
    %v188 = vand.u32 2147483647, %v138
    %vm189 = vcmp.lt.f32.partialorder %v188, 0.0004427343
    %v190 = vsel %vm189, %v187, %v184
    %v191 = vadd.f32 %v161, %v172
    %v192 = vadd.f32 %v162, %v181
    %v193 = vadd.f32 %v163, %v190
    %v194 = vadd.f32 %v134, 1.0
    %v195 = vadd.f32 %v136, 1.0
    %v196 = vadd.f32 %v138, 1.0
    %v197 = vrcp.pop %v194
    %v198 = vmul.f32 1.0, %v197
    %v199 = vrcp.pop %v195
    %v200 = vmul.f32 1.0, %v199
    %v201 = vrcp.pop %v196
    %v202 = vmul.f32 1.0, %v201
    %vm203 = vcmp.ge.f32.partialorder %v114, 0.0
    %vm204 = vcmp.ge.f32.partialorder %v120, 0.0
    %vm205 = vcmp.ge.f32.partialorder %v126, 0.0
    %v206 = vsub.f32 1.0, %v198
    %v207 = vsub.f32 1.0, %v200
    %v208 = vsub.f32 1.0, %v202
    %v209 = vsel %vm203, %v198, %v206
    %v210 = vsel %vm204, %v200, %v207
    %v211 = vsel %vm205, %v202, %v208
    %v212 = vmul.f32 %v209, %v146
    %v213 = vmul.f32 %v210, %v150
    %v214 = vmul.f32 %v211, %v154
    %v215 = vsub.f32 1.0, %v209
    %v216 = vsub.f32 1.0, %v210
    %v217 = vsub.f32 1.0, %v211
    %v218 = vsub.f32 1.0, %v105
    %v220 = vlaneseq
    %v221 = vshrl.u32 %v220, 7
    %v222 = vsub.s32 0, %v221
    %v223 = vrot.slane %v218, %v222
    %v224 = vlaneseq
    %v225 = vshrl.u32 %v224, 7
    %v226 = vsub.s32 1, %v225
    %v227 = vrot.slane %v218, %v226
    %v228 = vlaneseq
    %v229 = vshrl.u32 %v228, 7
    %v230 = vsub.s32 2, %v229
    %v231 = vrot.slane %v218, %v230
    %v235 = vmul.f32 %v215, %v223
    %v236 = vmul.f32 %v216, %v227
    %v237 = vmul.f32 %v217, %v231
    %v238 = vadd.f32 %v212, %v235
    %v239 = vadd.f32 %v213, %v236
    %v240 = vadd.f32 %v214, %v237
    %v241 = vsub.f32 1.0, %v238
    %v242 = vsub.f32 1.0, %v239
    %v243 = vsub.f32 1.0, %v240
    %v244 = vmul.f32 %v241, %v241
    %v245 = vmul.f32 %v242, %v242
    %v246 = vmul.f32 %v243, %v243
    %v247 = vmul.f32 %v191, %v244
    %v248 = vmul.f32 %v192, %v245
    %v249 = vmul.f32 %v193, %v246
    %v250 = vmul.f32 %v218, 0.0
    %v251 = vadd.f32 %v105, %v250
    %v255 = vcombine.low %v247, %v248
    %v257 = vunpack.c.l.s4 1966171168
    %v258 = vunpack.c.0.s8 %v257
    %v259 = vlaneseq
    %v260 = vshrl.u32 %v259, 7
    %v261 = vsub.s32 %v258, %v260
    %v262 = vrot.slane %v255, %v261
    %v264 = vunpack.c.l.s4 1966171168
    %v265 = vunpack.c.0.s8 %v264
    %v266 = vlaneseq
    %v267 = vshrl.u32 %v266, 7
    %v268 = vsub.s32 %v265, %v267
    %v269 = vrot.slane %v249, %v268
    %v270 = vcombine.low %v262, %v269
    %v272 = vunpack.c.l.s4 1966171168
    %v273 = vunpack.c.0.s8 %v272
    %v274 = vlaneseq
    %v275 = vshrl.u32 %v274, 7
    %v276 = vsub.s32 %v273, %v275
    %v277 = vrot.slane %v270, %v276
    %v279 = vmul.f32 %v251, %v277
    %p280 = scmp.ge.s32.totalorder %s88, 0
    %p281 = scmp.lt.s32.totalorder %s88, 0
    // Predicated region
    $region26: #{tpu_custom_call.1} parent=1 // pred_check
      %p282 = pneg %p281
    $region27: #{tpu_custom_call.1} parent=1 // pred_check_branch
      %284 = sbr.rel (%p282) target = $region29
    $region28: #{tpu_custom_call.1} parent=1 // pred_region
      %v285 = vld [vmem:[#allocation2] sm:$0x7]
      %v286 = vadd.f32 %v285, %v279
      %v287 = vlaneseq
      %vm288 = vcmp.ge.s32.totalorder %v287, 0
      %vm289 = vcmp.lt.s32.totalorder %v287, 384
      %vm290 = vmand %vm288, %vm289
      %291 = vst.msk [vmem:[#allocation2] sm:$0x7] %vm290, %v286
    $region29: #{tpu_custom_call.1} parent=1 // pred_fallthru
      _
    // Predicated region
    $region30: #{tpu_custom_call.1} parent=1 // pred_check
      %p292 = pneg %p280
    $region31: #{tpu_custom_call.1} parent=1 // pred_check_branch
      %294 = sbr.rel (%p292) target = $region33
    $region32: #{tpu_custom_call.1} parent=1 // pred_region
      %v295 = vlaneseq
      %v296 = vand.u32 %v295, 127
      %v297 = vadd.s32 %v296, 128
      %v298 = vadd.s32 %v296, 256
      %v299 = vld [vmem:[#allocation2] sm:$0x7]
      %s300 = smul.u32 %s88, 384
      %v301 = vstv %s300
      %v302 = vadd.s32 %v296, %v301
      %v303 = vadd.s32 %v297, %v301
      %v304 = vadd.s32 %v298, %v301
      %vm305 = vcmp.lt.s32.totalorder %v302, 300
      %vm306 = vcmp.lt.s32.totalorder %v303, 300
      %vm307 = vcmp.lt.s32.totalorder %v304, 300
      %v309 = vlaneseq
      %v310 = vshrl.u32 %v309, 7
      %v311 = vsub.s32 0, %v310
      %v312 = vrot.slane %v279, %v311
      %v313 = vlaneseq
      %v314 = vshrl.u32 %v313, 7
      %v315 = vsub.s32 1, %v314
      %v316 = vrot.slane %v279, %v315
      %v317 = vlaneseq
      %v318 = vshrl.u32 %v317, 7
      %v319 = vsub.s32 2, %v318
      %v320 = vrot.slane %v279, %v319
      %v324 = vsel %vm305, %v312, 0.0
      %v325 = vsel %vm306, %v316, 0.0
      %v326 = vsel %vm307, %v320, 0.0
      %v330 = vcombine.low %v324, %v325
      %v332 = vunpack.c.l.s4 1966171168
      %v333 = vunpack.c.0.s8 %v332
      %v334 = vlaneseq
      %v335 = vshrl.u32 %v334, 7
      %v336 = vsub.s32 %v333, %v335
      %v337 = vrot.slane %v330, %v336
      %v339 = vunpack.c.l.s4 1966171168
      %v340 = vunpack.c.0.s8 %v339
      %v341 = vlaneseq
      %v342 = vshrl.u32 %v341, 7
      %v343 = vsub.s32 %v340, %v342
      %v344 = vrot.slane %v326, %v343
      %v345 = vcombine.low %v337, %v344
      %v347 = vunpack.c.l.s4 1966171168
      %v348 = vunpack.c.0.s8 %v347
      %v349 = vlaneseq
      %v350 = vshrl.u32 %v349, 7
      %v351 = vsub.s32 %v348, %v350
      %v352 = vrot.slane %v345, %v351
      %v354 = vadd.f32 %v299, %v352
      %v355 = vlaneseq
      %vm356 = vcmp.ge.s32.totalorder %v355, 0
      %vm357 = vcmp.lt.s32.totalorder %v355, 384
      %vm358 = vmand %vm356, %vm357
      %359 = vst.msk [vmem:[#allocation2] sm:$0x7] %vm358, %v354
    $region33: #{tpu_custom_call.1} parent=1 // pred_fallthru
      _
    // Predicated region
    $region34: #{tpu_custom_call.1} parent=1 // pred_check
      %p360 = pneg %p89
    $region35: #{tpu_custom_call.1} parent=1 // pred_check_branch
      %362 = sbr.rel (%p360) target = $region37
    $region36: #{tpu_custom_call.1} parent=1 // pred_region
      %v363 = vld [vmem:[#allocation2] sm:$0x7]
      %v365 = vlaneseq
      %v366 = vshrl.u32 %v365, 7
      %v367 = vsub.s32 0, %v366
      %v368 = vrot.slane %v363, %v367
      %v369 = vlaneseq
      %v370 = vshrl.u32 %v369, 7
      %v371 = vsub.s32 1, %v370
      %v372 = vrot.slane %v363, %v371
      %v373 = vlaneseq
      %v374 = vshrl.u32 %v373, 7
      %v375 = vsub.s32 2, %v374
      %v376 = vrot.slane %v363, %v375
      %vm380 = vcmask 1040384
      %v381 = vsel %vm380, %v368, 0.0
      %v382 = vsel %vm380, %v372, 0.0
      %v383 = vadd.f32 %v381, %v382
      %v384 = vsel %vm380, %v376, 0.0
      %v385 = vadd.f32 %v383, %v384
      %386 = vadd.xlane.f32.xlu0 %v385
      %v387 = vpop.xlane.xlu0 %386
      %v388 = vrot.slane %v387, 4
      %v389 = vadd.f32 %v387, %v388
      %v390 = vrot.slane %v389, 2
      %v391 = vadd.f32 %v389, %v390
      %v392 = vrot.slane %v391, 1
      %v393 = vadd.f32 %v391, %v392
      %s394 = vtos %v393
      %v395 = vstv %s394
      %vm396 = vcmask 0
      %397 = vst.msk [vmem:[#allocation8] sm:$0x1] %vm396, %v395
    $region37: #{tpu_custom_call.1} parent=1 // pred_fallthru
      _
    // Predicated region
    $region38: #{tpu_custom_call.1} parent=1 // pred_check
      _
    $region39: #{tpu_custom_call.1} parent=1 // pred_check_branch
      %399 = sbr.rel (0) target = $region41
    $region40: #{tpu_custom_call.1} parent=1 // pred_region
      %s401 = ssub.s32 16, 16
      %402 = vsyncadd [#allocation5], %s401
      %s404 = sshll.u32 [#allocation8], 4
      %s405 = int_to_ptr.vmem [resolvable:$true] %s404
      %407 = dma.vmem_to_hbm [thread:$0]  %s405, 16, %s3, [#allocation5]
    $region41: #{tpu_custom_call.1} parent=1 // pred_fallthru
      _
    // Predicated region
    $region42: #{tpu_custom_call.1} parent=1 // pred_check
      _
    $region43: #{tpu_custom_call.1} parent=1 // pred_check_branch
      %409 = sbr.rel (0) target = $region45
    $region44: #{tpu_custom_call.1} parent=1 // pred_region
      %410 = dma.done [#allocation5], 16
    $region45: #{tpu_custom_call.1} parent=1 // pred_fallthru
      _
    %411 = vsyncpa [#allocation4], 1
    %412 = vsyncpa [#allocation7], 1
    %413 = vsyncpa [#allocation5], 1

</llo_original>
